<compile_context>
chip_gen: v6e
topology: v6e:2x2x1
jax: 0.10.0
libtpu: 0.0.40
codegen_flags: <defaults>
</compile_context>

<pallas_src>
import functools

import jax
import jax.numpy as jnp
from jax.experimental import pallas as pl
from jax.experimental.pallas import tpu as pltpu


def _pred_head_kernel(x_ref, w1_ref, b1_ref, w2_ref, b2_ref, o_ref,
                      *, num_anchors, negative_slope):
    """1x1-conv prediction head on a channel-first slab.

    x:  (B, Cin, Np)    bf16 (spatial flattened, lane-padded to Np)
    w1: (Hdim, Cin)     bf16   -- PyTorch Conv2d weight layout (out, in)
    b1: (Hdim, 1)       f32
    w2: (Cp,  Hdim)     bf16   -- output channels padded to a multiple of 8
    b2: (Cp, 1)         f32
    o:  (B, Cp, Np)     f32
    """
    w1 = w1_ref[...]
    b1 = b1_ref[...]
    w2 = w2_ref[...]
    b2 = b2_ref[...]

    cp, np_ = o_ref.shape[1], o_ref.shape[2]

    # Channel-structure masks: channels [0, 5A) are interleaved
    # [conf, tx, ty, tw, th] per anchor; the rest are class scores / padding.
    # Built once per call (static num_anchors), hoisted out of the batch loop.
    ch = jax.lax.broadcasted_iota(jnp.int32, (cp, np_), 0)
    rem = ch % 5
    in_box = ch < 5 * num_anchors
    conf_mask = in_box & (rem == 0)
    xy_mask = in_box & ((rem == 1) | (rem == 2))

    for b in range(x_ref.shape[0]):          # tiny static batch -> unrolled
        xb = x_ref[b]                        # (Cin, Np) bf16

        # conv1 (1x1)  ==  W1 @ x   (MXU, f32 accumulation) + bias (f32, VPU)
        h = jnp.dot(w1, xb, preferred_element_type=jnp.float32) + b1

        # TODO(synk): nn.Dropout(drop_ratio) is identity at inference time;
        # training-mode dropout (random mask + 1/(1-p) scaling) is not implemented.

        # LeakyReLU (default negative_slope = 0.01), kept in f32.
        h = jnp.where(h >= 0.0, h, negative_slope * h)

        # conv2 (1x1)  ==  W2 @ h
        p = jnp.dot(w2, h.astype(w2.dtype),
                    preferred_element_type=jnp.float32) + b2

        # conf channels -> sigmoid ; tx/ty channels -> sigmoid - 0.5 ; rest raw.
        # Padded channels are untouched (masks are False there).
        sig = jax.nn.sigmoid(p)              # EUP; hidden under VPU/MXU work
        p = jnp.where(conf_mask, sig, jnp.where(xy_mask, sig - 0.5, p))

        o_ref[b] = p.astype(o_ref.dtype)


def _run_pred_head(x, w1, b1, w2, b2, *, num_anchors):
    """pallas_call wrapper: x (B,Cin,Np), weights in (out,in) layout, padded."""
    B, Cin, Np = x.shape
    Cp, Hdim = w2.shape

    kernel = functools.partial(_pred_head_kernel,
                               num_anchors=num_anchors,
                               negative_slope=0.01)

    flops = 2 * B * Np * Hdim * (Cin + Cp)
    bytes_accessed = (x.size * x.dtype.itemsize
                      + w1.size * w1.dtype.itemsize
                      + w2.size * w2.dtype.itemsize
                      + (b1.size + b2.size) * 4
                      + B * Cp * Np * 4)

    return pl.pallas_call(
        kernel,
        out_shape=jax.ShapeDtypeStruct((B, Cp, Np), jnp.float32),
        in_specs=[
            pl.BlockSpec(x.shape, lambda: (0, 0, 0)),
            pl.BlockSpec(w1.shape, lambda: (0, 0)),
            pl.BlockSpec(b1.shape, lambda: (0, 0)),
            pl.BlockSpec(w2.shape, lambda: (0, 0)),
            pl.BlockSpec(b2.shape, lambda: (0, 0)),
        ],
        out_specs=pl.BlockSpec((B, Cp, Np), lambda: (0, 0, 0)),
        compiler_params=pltpu.CompilerParams(vmem_limit_bytes=4 * 1024 * 1024),
        cost_estimate=pl.CostEstimate(
            flops=int(flops),
            transcendentals=int(B * Cp * Np),
            bytes_accessed=int(bytes_accessed),
        ),
    )(x, w1, b1, w2, b2)


def prediction_network_forward(features, params, num_anchors, num_classes,
                               pos_anchor_idx=None, neg_anchor_idx=None,
                               matmul_dtype=jnp.bfloat16):
    """Mirrors PredictionNetwork.forward.

    features: (B, in_dim, H, W) float32 (NCHW, like PyTorch)
    params:   w1 (Hdim, Cin), b1 (Hdim,), w2 (5A+C, Hdim), b2 (5A+C,)
              -- i.e. exactly PyTorch's Conv2d weight.squeeze() / bias layout.
    """
    B, Cin, H, W = features.shape
    A, C = num_anchors, num_classes
    out_dim = 5 * A + C
    HW = H * W

    # Tile-aligned padding: spatial -> multiple of 128 (lane-dense stores),
    # output channels -> multiple of 8 (sublane-aligned).
    n_pad = ((HW + 127) // 128) * 128
    c_pad = ((out_dim + 7) // 8) * 8

    # Channel-first slab; the reshape only merges trailing dims (no transpose).
    x = features.reshape(B, Cin, HW)
    x = jnp.pad(x, ((0, 0), (0, 0), (0, n_pad - HW))).astype(matmul_dtype)

    hidden_dim = params["w1"].shape[0]
    w1 = params["w1"].astype(matmul_dtype)                                  # (Hdim, Cin)
    b1 = params["b1"].reshape(hidden_dim, 1).astype(jnp.float32)            # (Hdim, 1)
    w2 = jnp.pad(params["w2"],
                 ((0, c_pad - out_dim), (0, 0))).astype(matmul_dtype)       # (Cp, Hdim)
    b2 = jnp.pad(params["b2"],
                 (0, c_pad - out_dim)).reshape(c_pad, 1).astype(jnp.float32)

    pred_pad = _run_pred_head(x, w1, b1, w2, b2, num_anchors=A)             # (B, Cp, Np) f32

    if pos_anchor_idx is not None:
        # --- training path: gather directly from the padded slab -----------
        # Flat anchor index layout (PyTorch): idx = ((b*A + a)*H + h)*W + w
        def anchor_vectors(idx):
            b_i = idx // (A * HW)
            a_i = (idx // HW) % A
            s_i = idx % HW                       # spatial pad is trailing -> lane index 1:1
            ch = 5 * a_i[:, None] + jnp.arange(5)[None, :]
            return pred_pad[b_i[:, None], ch, s_i[:, None]]                 # (M, 5)

        pos = anchor_vectors(pos_anchor_idx)
        neg = anchor_vectors(neg_anchor_idx)
        # conf / xy sigmoids were applied per-channel inside the kernel, which
        # commutes with the gather -> identical to PyTorch's gather-then-sigmoid.
        conf_scores = jnp.concatenate([pos[:, 0:1], neg[:, 0:1]], axis=0)   # (2M, 1)
        offsets = pos[:, 1:]                                                # (M, 4)

        b_i = pos_anchor_idx // (A * HW)
        s_i = pos_anchor_idx % HW
        cls_ch = 5 * A + jnp.arange(C)[None, :]
        class_scores = pred_pad[b_i[:, None], cls_ch, s_i[:, None]]         # (M, C)
        return conf_scores, offsets, class_scores

    # --- inference path: outputs are channel-first already -----------------
    box = pred_pad[:, :5 * A, :HW].reshape(B, A, 5, H, W)
    conf_scores = box[:, :, 0, :, :]                    # (B, A, H, W)      already sigmoided
    offsets = box[:, :, 1:, :, :]                       # (B, A, 4, H, W)   xy already sigmoid-0.5
    class_scores = pred_pad[:, 5 * A:out_dim, :HW].reshape(B, C, H, W)
    return conf_scores, offsets, class_scores


def init_params(key, in_dim, hidden_dim, num_anchors, num_classes):
    """Weights in PyTorch Conv2d layout: weight (out, in), bias (out,)."""
    out_dim = 5 * num_anchors + num_classes
    k1, k2, k3, k4 = jax.random.split(key, 4)
    w1 = jax.random.normal(k1, (hidden_dim, in_dim), jnp.float32) * 0.05
    b1 = jax.random.normal(k2, (hidden_dim,), jnp.float32) * 0.05
    w2 = jax.random.normal(k3, (out_dim, hidden_dim), jnp.float32) * 0.05
    b2 = jax.random.normal(k4, (out_dim,), jnp.float32) * 0.05
    return {"w1": w1, "b1": b1, "w2": w2, "b2": b2}


def _reference_forward(features, params, num_anchors, num_classes,
                       pos_anchor_idx=None, neg_anchor_idx=None):
    """Pure-JAX f32 mirror of the PyTorch module (for a numeric sanity check)."""
    B, Cin, H, W = features.shape
    A, C = num_anchors, num_classes
    x = features.reshape(B, Cin, H * W)
    w1, b1, w2, b2 = params["w1"], params["b1"], params["w2"], params["b2"]
    h = jnp.einsum("oc,bcn->bon", w1, x) + b1[None, :, None]
    h = jnp.where(h >= 0.0, h, 0.01 * h)
    p = jnp.einsum("oc,bcn->bon", w2, h) + b2[None, :, None]
    pred = p.reshape(B, 5 * A + C, H, W)
    class_scores = pred[:, 5 * A:, :, :]
    cno = pred[:, :5 * A].reshape(B, A, 5, H, W)
    if pos_anchor_idx is not None:
        flat = jnp.transpose(cno, (0, 1, 3, 4, 2)).reshape(-1, 5)
        pos = flat[pos_anchor_idx]
        neg = flat[neg_anchor_idx]
        conf = jax.nn.sigmoid(jnp.concatenate([pos[:, :1], neg[:, :1]], axis=0))
        off = pos[:, 1:]
        off = off.at[:, :2].set(jax.nn.sigmoid(off[:, :2]) - 0.5)
        cs = jnp.transpose(class_scores, (0, 2, 3, 1))
        cs = jnp.broadcast_to(cs[:, None], (B, A, H, W, C)).reshape(-1, C)
        cls = cs[pos_anchor_idx]
        return conf, off, cls
    conf = jax.nn.sigmoid(cno[:, :, 0])
    off = cno[:, :, 1:]
    off = off.at[:, :, :2].set(jax.nn.sigmoid(off[:, :, :2]) - 0.5)
    return conf, off, class_scores


if __name__ == "__main__":
    # Small, module-consistent shapes: features are (B, in_dim, 7, 7).
    B, in_dim, H, W = 2, 16, 7, 7
    hidden_dim, num_anchors, num_classes = 32, 9, 20

    key = jax.random.PRNGKey(0)
    k_feat, k_param, k_idx = jax.random.split(key, 3)

    features = jax.random.normal(k_feat, (B, in_dim, H, W), jnp.float32)
    params = init_params(k_param, in_dim, hidden_dim, num_anchors, num_classes)

    fwd = jax.jit(functools.partial(prediction_network_forward,
                                    num_anchors=num_anchors,
                                    num_classes=num_classes))

    # ---- inference path ----------------------------------------------------
    conf, offsets, cls = fwd(features, params)
    jax.block_until_ready((conf, offsets, cls))
    assert conf.shape == (B, num_anchors, H, W)
    assert offsets.shape == (B, num_anchors, 4, H, W)
    assert cls.shape == (B, num_classes, H, W)

    # ---- training path -----------------------------------------------------
    M = 8
    total = B * num_anchors * H * W
    pos_idx = jax.random.randint(k_idx, (M,), 0, total)
    neg_idx = (pos_idx + 7) % total
    conf_t, off_t, cls_t = fwd(features, params,
                               pos_anchor_idx=pos_idx, neg_anchor_idx=neg_idx)
    jax.block_until_ready((conf_t, off_t, cls_t))
    assert conf_t.shape == (2 * M, 1)
    assert off_t.shape == (M, 4)
    assert cls_t.shape == (M, num_classes)

    # ---- numeric sanity check against a pure-JAX f32 reference --------------
    # (bf16 MXU operands -> loose tolerance; structural bugs would be O(0.1+).)
    ref_inf = _reference_forward(features, params, num_anchors, num_classes)
    ref_trn = _reference_forward(features, params, num_anchors, num_classes,
                                 pos_anchor_idx=pos_idx, neg_anchor_idx=neg_idx)
    for got, want in zip((conf, offsets, cls) + (conf_t, off_t, cls_t),
                         ref_inf + ref_trn):
        assert got.shape == want.shape
        assert float(jnp.max(jnp.abs(got - want))) < 5e-2

    print("KERNEL_OK")
</pallas_src>

<mosaic_0001>
module attributes {stable_mosaic.version = 11 : i64} {
  func.func @_pred_head_kernel(%arg0: memref<2x16x128xbf16, #tpu.memory_space<vmem>>, %arg1: memref<32x16xbf16, #tpu.memory_space<vmem>>, %arg2: memref<32x1xf32, #tpu.memory_space<vmem>>, %arg3: memref<72x32xbf16, #tpu.memory_space<vmem>>, %arg4: memref<72x1xf32, #tpu.memory_space<vmem>>, %arg5: memref<2x72x128xf32, #tpu.memory_space<vmem>>) attributes {dimension_semantics = [], scalar_prefetch = 0 : i64, scratch_operands = 0 : i64, tpu.core_type = #tpu.core_type<tc>} {
    %c0 = arith.constant 0 : index
    %c0_0 = arith.constant 0 : index
    %0 = vector.load %arg1[%c0, %c0_0] : memref<32x16xbf16, #tpu.memory_space<vmem>>, vector<32x16xbf16>
    %c0_1 = arith.constant 0 : index
    %c0_2 = arith.constant 0 : index
    %1 = vector.load %arg2[%c0_1, %c0_2] : memref<32x1xf32, #tpu.memory_space<vmem>>, vector<32x1xf32>
    %c0_3 = arith.constant 0 : index
    %c0_4 = arith.constant 0 : index
    %2 = vector.load %arg3[%c0_3, %c0_4] : memref<72x32xbf16, #tpu.memory_space<vmem>>, vector<72x32xbf16>
    %c0_5 = arith.constant 0 : index
    %c0_6 = arith.constant 0 : index
    %3 = vector.load %arg4[%c0_5, %c0_6] : memref<72x1xf32, #tpu.memory_space<vmem>>, vector<72x1xf32>
    %4 = tpu.iota {dimensions = array<i32: 0>} : vector<72x128xi32>
    %c5_i32 = arith.constant 5 : i32
    %c0_i32 = arith.constant 0 : i32
    %5 = arith.cmpi eq, %c5_i32, %c0_i32 : i32
    %c1_i32 = arith.constant 1 : i32
    %6 = arith.select %5, %c1_i32, %c5_i32 : i32
    %7 = vector.broadcast %6 : i32 to vector<72x128xi32>
    %8 = arith.remsi %4, %7 : vector<72x128xi32>
    %c0_i32_7 = arith.constant 0 : i32
    %9 = vector.broadcast %c0_i32_7 : i32 to vector<72x128xi32>
    %10 = arith.cmpi ne, %8, %9 : vector<72x128xi32>
    %c0_i32_8 = arith.constant 0 : i32
    %11 = vector.broadcast %c0_i32_8 : i32 to vector<72x128xi32>
    %12 = arith.cmpi slt, %8, %11 : vector<72x128xi32>
    %c0_i32_9 = arith.constant 0 : i32
    %13 = arith.cmpi slt, %6, %c0_i32_9 : i32
    %14 = vector.broadcast %13 : i1 to vector<72x128xi1>
    %15 = vector.broadcast %14 : vector<72x128xi1> to vector<72x128xi1>
    %16 = arith.xori %12, %15 : vector<72x128xi1>
    %17 = arith.andi %16, %10 : vector<72x128xi1>
    %18 = vector.broadcast %6 : i32 to vector<72x128xi32>
    %19 = arith.addi %8, %18 : vector<72x128xi32>
    %20 = arith.select %17, %19, %8 : vector<72x128xi1>, vector<72x128xi32>
    %c45_i32 = arith.constant 45 : i32
    %21 = vector.broadcast %c45_i32 : i32 to vector<72x128xi32>
    %22 = arith.cmpi slt, %4, %21 : vector<72x128xi32>
    %c0_i32_10 = arith.constant 0 : i32
    %23 = vector.broadcast %c0_i32_10 : i32 to vector<72x128xi32>
    %24 = arith.cmpi eq, %20, %23 : vector<72x128xi32>
    %25 = arith.andi %22, %24 : vector<72x128xi1>
    %c1_i32_11 = arith.constant 1 : i32
    %26 = vector.broadcast %c1_i32_11 : i32 to vector<72x128xi32>
    %27 = arith.cmpi eq, %20, %26 : vector<72x128xi32>
    %c2_i32 = arith.constant 2 : i32
    %28 = vector.broadcast %c2_i32 : i32 to vector<72x128xi32>
    %29 = arith.cmpi eq, %20, %28 : vector<72x128xi32>
    %30 = arith.ori %27, %29 : vector<72x128xi1>
    %31 = arith.andi %22, %30 : vector<72x128xi1>
    %c0_12 = arith.constant 0 : index
    %c0_13 = arith.constant 0 : index
    %c0_14 = arith.constant 0 : index
    %32 = vector.load %arg0[%c0_12, %c0_13, %c0_14] : memref<2x16x128xbf16, #tpu.memory_space<vmem>>, vector<1x16x128xbf16>
    %33 = vector.shape_cast %32 : vector<1x16x128xbf16> to vector<16x128xbf16>
    %cst = arith.constant dense<0.000000e+00> : vector<32x128xf32>
    %34 = tpu.matmul %0, %33, %cst {dimension_numbers = #tpu.dot_dimension_numbers<[1], [0], [0], [1], [0, 0, 1, 1], [], []>} : vector<32x16xbf16>, vector<16x128xbf16>, vector<32x128xf32> -> vector<32x128xf32>
    %35 = vector.broadcast %1 : vector<32x1xf32> to vector<32x128xf32>
    %36 = arith.addf %34, %35 : vector<32x128xf32>
    %cst_15 = arith.constant 0.000000e+00 : f32
    %37 = vector.broadcast %cst_15 : f32 to vector<32x128xf32>
    %38 = arith.cmpf oge, %36, %37 : vector<32x128xf32>
    %cst_16 = arith.constant 0.00999999977 : f32
    %39 = vector.broadcast %cst_16 : f32 to vector<32x128xf32>
    %40 = arith.mulf %39, %36 : vector<32x128xf32>
    %41 = arith.select %38, %36, %40 : vector<32x128xi1>, vector<32x128xf32>
    %42 = arith.truncf %41 : vector<32x128xf32> to vector<32x128xbf16>
    %cst_17 = arith.constant dense<0.000000e+00> : vector<72x128xf32>
    %43 = tpu.matmul %2, %42, %cst_17 {dimension_numbers = #tpu.dot_dimension_numbers<[1], [0], [0], [1], [0, 0, 1, 1], [], []>} : vector<72x32xbf16>, vector<32x128xbf16>, vector<72x128xf32> -> vector<72x128xf32>
    %44 = vector.broadcast %3 : vector<72x1xf32> to vector<72x128xf32>
    %45 = arith.addf %43, %44 : vector<72x128xf32>
    %46 = arith.negf %45 : vector<72x128xf32>
    %47 = math.exp %46 : vector<72x128xf32>
    %cst_18 = arith.constant 1.000000e+00 : f32
    %48 = vector.broadcast %cst_18 : f32 to vector<72x128xf32>
    %49 = arith.addf %48, %47 : vector<72x128xf32>
    %50 = arith.divf %48, %49 : vector<72x128xf32>
    %cst_19 = arith.constant 5.000000e-01 : f32
    %51 = vector.broadcast %cst_19 : f32 to vector<72x128xf32>
    %52 = arith.subf %50, %51 : vector<72x128xf32>
    %53 = arith.select %31, %52, %45 : vector<72x128xi1>, vector<72x128xf32>
    %54 = arith.select %25, %50, %53 : vector<72x128xi1>, vector<72x128xf32>
    %c0_20 = arith.constant 0 : index
    %c0_21 = arith.constant 0 : index
    %c0_22 = arith.constant 0 : index
    %55 = vector.load %arg5[%c0_20, %c0_21, %c0_22] : memref<2x72x128xf32, #tpu.memory_space<vmem>>, vector<1x72x128xf32>
    %56 = vector.shape_cast %55 : vector<1x72x128xf32> to vector<72x128xf32>
    %57 = vector.shape_cast %54 : vector<72x128xf32> to vector<1x72x128xf32>
    tpu.vector_store %arg5[%c0_20, %c0_21, %c0_22], %57 {strides = array<i32>} : memref<2x72x128xf32, #tpu.memory_space<vmem>>, vector<1x72x128xf32>,
    %c1 = arith.constant 1 : index
    %c0_23 = arith.constant 0 : index
    %c0_24 = arith.constant 0 : index
    %58 = vector.load %arg0[%c1, %c0_23, %c0_24] : memref<2x16x128xbf16, #tpu.memory_space<vmem>>, vector<1x16x128xbf16>
    %59 = vector.shape_cast %58 : vector<1x16x128xbf16> to vector<16x128xbf16>
    %cst_25 = arith.constant dense<0.000000e+00> : vector<32x128xf32>
    %60 = tpu.matmul %0, %59, %cst_25 {dimension_numbers = #tpu.dot_dimension_numbers<[1], [0], [0], [1], [0, 0, 1, 1], [], []>} : vector<32x16xbf16>, vector<16x128xbf16>, vector<32x128xf32> -> vector<32x128xf32>
    %61 = vector.broadcast %1 : vector<32x1xf32> to vector<32x128xf32>
    %62 = arith.addf %60, %61 : vector<32x128xf32>
    %cst_26 = arith.constant 0.000000e+00 : f32
    %63 = vector.broadcast %cst_26 : f32 to vector<32x128xf32>
    %64 = arith.cmpf oge, %62, %63 : vector<32x128xf32>
    %cst_27 = arith.constant 0.00999999977 : f32
    %65 = vector.broadcast %cst_27 : f32 to vector<32x128xf32>
    %66 = arith.mulf %65, %62 : vector<32x128xf32>
    %67 = arith.select %64, %62, %66 : vector<32x128xi1>, vector<32x128xf32>
    %68 = arith.truncf %67 : vector<32x128xf32> to vector<32x128xbf16>
    %cst_28 = arith.constant dense<0.000000e+00> : vector<72x128xf32>
    %69 = tpu.matmul %2, %68, %cst_28 {dimension_numbers = #tpu.dot_dimension_numbers<[1], [0], [0], [1], [0, 0, 1, 1], [], []>} : vector<72x32xbf16>, vector<32x128xbf16>, vector<72x128xf32> -> vector<72x128xf32>
    %70 = vector.broadcast %3 : vector<72x1xf32> to vector<72x128xf32>
    %71 = arith.addf %69, %70 : vector<72x128xf32>
    %72 = arith.negf %71 : vector<72x128xf32>
    %73 = math.exp %72 : vector<72x128xf32>
    %cst_29 = arith.constant 1.000000e+00 : f32
    %74 = vector.broadcast %cst_29 : f32 to vector<72x128xf32>
    %75 = arith.addf %74, %73 : vector<72x128xf32>
    %76 = arith.divf %74, %75 : vector<72x128xf32>
    %cst_30 = arith.constant 5.000000e-01 : f32
    %77 = vector.broadcast %cst_30 : f32 to vector<72x128xf32>
    %78 = arith.subf %76, %77 : vector<72x128xf32>
    %79 = arith.select %31, %78, %71 : vector<72x128xi1>, vector<72x128xf32>
    %80 = arith.select %25, %76, %79 : vector<72x128xi1>, vector<72x128xf32>
    %c1_31 = arith.constant 1 : index
    %c0_32 = arith.constant 0 : index
    %c0_33 = arith.constant 0 : index
    %81 = vector.load %arg5[%c1_31, %c0_32, %c0_33] : memref<2x72x128xf32, #tpu.memory_space<vmem>>, vector<1x72x128xf32>
    %82 = vector.shape_cast %81 : vector<1x72x128xf32> to vector<72x128xf32>
    %83 = vector.shape_cast %80 : vector<72x128xf32> to vector<1x72x128xf32>
    tpu.vector_store %arg5[%c1_31, %c0_32, %c0_33], %83 {strides = array<i32>} : memref<2x72x128xf32, #tpu.memory_space<vmem>>, vector<1x72x128xf32>,
    return
  }
}

</mosaic_0001>

<llo_original>
// kernel: prediction_network_forward.1
$region0: #{prediction_network_forward.1}
  #allocation0 [shape = 'u32[]', space=smem, size = 0x4, offset = 0x4, fixed_abs, tag = 'smem constant byte address 0x4 - core index']
  #allocation1 [shape = 'u32[144,128]{1,0:T(1,128)}', space=vmem, size = 0x12000, scoped, tag = 'internal scratch']
  %s0 = inlined_call_operand.vmem [shape: bf16[2,16,128], index: 0, kind: input, shape index: {}]
  %s1 = inlined_call_operand.vmem [shape: bf16[32,16], index: 1, kind: input, shape index: {}]
  %s2 = inlined_call_operand.vmem [shape: f32[32,1], index: 2, kind: input, shape index: {}]
  %s3 = inlined_call_operand.vmem [shape: bf16[72,32], index: 3, kind: input, shape index: {}]
  %s4 = inlined_call_operand.vmem [shape: f32[72,1], index: 4, kind: input, shape index: {}]
  %s5 = inlined_call_operand.vmem [shape: f32[2,72,128], index: 5, kind: output, shape index: {}]
  %s6 = sld [smem:[#allocation0]]
  $region30: #{prediction_network_forward.1} parent=0
    _
  %s8 = ssub.s32 1, %s6
  %s9 = scalar_select 0, %s8, %s6
  // Predicated region
  $region2: #{prediction_network_forward.1} parent=0 // pred_check
    _
  $region3: #{prediction_network_forward.1} parent=0 // pred_check_branch
    %11 = sbr.rel (0) target = $region5
  $region4: #{prediction_network_forward.1} parent=0 // pred_region
    _
  $region5: #{prediction_network_forward.1} parent=0 // pred_fallthru
    _
  // Predicated region
  $region6: #{prediction_network_forward.1} parent=0 // pred_check
    _
  $region7: #{prediction_network_forward.1} parent=0 // pred_check_branch
    %13 = sbr.rel (0) target = $region9
  $region8: #{prediction_network_forward.1} parent=0 // pred_region
    _
  $region9: #{prediction_network_forward.1} parent=0 // pred_fallthru
    _
  // Predicated region
  $region10: #{prediction_network_forward.1} parent=0 // pred_check
    _
  $region11: #{prediction_network_forward.1} parent=0 // pred_check_branch
    %15 = sbr.rel (0) target = $region13
  $region12: #{prediction_network_forward.1} parent=0 // pred_region
    _
  $region13: #{prediction_network_forward.1} parent=0 // pred_fallthru
    _
  // Predicated region
  $region14: #{prediction_network_forward.1} parent=0 // pred_check
    _
  $region15: #{prediction_network_forward.1} parent=0 // pred_check_branch
    %17 = sbr.rel (0) target = $region17
  $region16: #{prediction_network_forward.1} parent=0 // pred_region
    _
  $region17: #{prediction_network_forward.1} parent=0 // pred_fallthru
    _
  // Predicated region
  $region18: #{prediction_network_forward.1} parent=0 // pred_check
    _
  $region19: #{prediction_network_forward.1} parent=0 // pred_check_branch
    %19 = sbr.rel (0) target = $region21
  $region20: #{prediction_network_forward.1} parent=0 // pred_region
    _
  $region21: #{prediction_network_forward.1} parent=0 // pred_fallthru
    _
  %v21 = vld [vmem:[%s1] sm:$0xf]
  %v22 = vld [vmem:[%s1 + $0x4] sm:$0xf]
  %v23 = vld [vmem:[%s1 + $0x8] sm:$0xf]
  %v24 = vld [vmem:[%s1 + $0xc] sm:$0xf]
  %v25 = vld [vmem:[%s2] sm:$0xff]
  %v26 = vld [vmem:[%s2 + $0x8] sm:$0xff]
  %v27 = vld [vmem:[%s2 + $0x10] sm:$0xff]
  %v28 = vld [vmem:[%s2 + $0x18] sm:$0xff]
  %v29 = vld [vmem:[%s3] sm:$0xf]
  %v30 = vld [vmem:[%s3 + $0x4] sm:$0xf]
  %v31 = vld [vmem:[%s3 + $0x8] sm:$0xf]
  %v32 = vld [vmem:[%s3 + $0xc] sm:$0xf]
  %v33 = vld [vmem:[%s3 + $0x10] sm:$0xf]
  %v34 = vld [vmem:[%s3 + $0x14] sm:$0xf]
  %v35 = vld [vmem:[%s3 + $0x18] sm:$0xf]
  %v36 = vld [vmem:[%s3 + $0x1c] sm:$0xf]
  %v37 = vld [vmem:[%s3 + $0x20] sm:$0xf]
  %v38 = vld [vmem:[%s4] sm:$0xff]
  %v39 = vld [vmem:[%s4 + $0x8] sm:$0xff]
  %v40 = vld [vmem:[%s4 + $0x10] sm:$0xff]
  %v41 = vld [vmem:[%s4 + $0x18] sm:$0xff]
  %v42 = vld [vmem:[%s4 + $0x20] sm:$0xff]
  %v43 = vld [vmem:[%s4 + $0x28] sm:$0xff]
  %v44 = vld [vmem:[%s4 + $0x30] sm:$0xff]
  %v45 = vld [vmem:[%s4 + $0x38] sm:$0xff]
  %v46 = vld [vmem:[%s4 + $0x40] sm:$0xff]
  %v47 = vlaneseq
  %v48 = vshrl.u32 %v47, 7
  %v49 = vadd.s32 %v48, 8
  %v50 = vadd.s32 %v48, 16
  %v51 = vadd.s32 %v48, 24
  %v52 = vadd.s32 %v48, 32
  %v53 = vadd.s32 %v48, 40
  %v54 = vadd.s32 %v48, 48
  %v55 = vadd.s32 %v48, 56
  %v56 = vadd.s32 %v48, 64
  %vm57 = vcmp.lt.s32.totalorder %v48, 0
  %v58 = vsub.s32 0, %v48
  %v59 = vsel %vm57, %v58, %v48
  %v60 = vmul.u32.u64.compose %v59, 3435973837
  %v61 = vextract.low.u32 %v60
  %v62 = vextract.high.u32 %v60
  %v63 = vshrl.u32 %v62, 2
  %v64 = vmul.u32 %v63, 5
  %v65 = vsub.s32 %v59, %v64
  %v66 = vsub.s32 0, %v65
  %v67 = vsel %vm57, %v66, %v65
  %vm68 = vcmp.lt.s32.totalorder %v49, 0
  %v69 = vsub.s32 0, %v49
  %v70 = vsel %vm68, %v69, %v49
  %v71 = vmul.u32.u64.compose %v70, 3435973837
  %v72 = vextract.low.u32 %v71
  %v73 = vextract.high.u32 %v71
  %v74 = vshrl.u32 %v73, 2
  %v75 = vmul.u32 %v74, 5
  %v76 = vsub.s32 %v70, %v75
  %v77 = vsub.s32 0, %v76
  %v78 = vsel %vm68, %v77, %v76
  %vm79 = vcmp.lt.s32.totalorder %v50, 0
  %v80 = vsub.s32 0, %v50
  %v81 = vsel %vm79, %v80, %v50
  %v82 = vmul.u32.u64.compose %v81, 3435973837
  %v83 = vextract.low.u32 %v82
  %v84 = vextract.high.u32 %v82
  %v85 = vshrl.u32 %v84, 2
  %v86 = vmul.u32 %v85, 5
  %v87 = vsub.s32 %v81, %v86
  %v88 = vsub.s32 0, %v87
  %v89 = vsel %vm79, %v88, %v87
  %vm90 = vcmp.lt.s32.totalorder %v51, 0
  %v91 = vsub.s32 0, %v51
  %v92 = vsel %vm90, %v91, %v51
  %v93 = vmul.u32.u64.compose %v92, 3435973837
  %v94 = vextract.low.u32 %v93
  %v95 = vextract.high.u32 %v93
  %v96 = vshrl.u32 %v95, 2
  %v97 = vmul.u32 %v96, 5
  %v98 = vsub.s32 %v92, %v97
  %v99 = vsub.s32 0, %v98
  %v100 = vsel %vm90, %v99, %v98
  %vm101 = vcmp.lt.s32.totalorder %v52, 0
  %v102 = vsub.s32 0, %v52
  %v103 = vsel %vm101, %v102, %v52
  %v104 = vmul.u32.u64.compose %v103, 3435973837
  %v105 = vextract.low.u32 %v104
  %v106 = vextract.high.u32 %v104
  %v107 = vshrl.u32 %v106, 2
  %v108 = vmul.u32 %v107, 5
  %v109 = vsub.s32 %v103, %v108
  %v110 = vsub.s32 0, %v109
  %v111 = vsel %vm101, %v110, %v109
  %vm112 = vcmp.lt.s32.totalorder %v53, 0
  %v113 = vsub.s32 0, %v53
  %v114 = vsel %vm112, %v113, %v53
  %v115 = vmul.u32.u64.compose %v114, 3435973837
  %v116 = vextract.low.u32 %v115
  %v117 = vextract.high.u32 %v115
  %v118 = vshrl.u32 %v117, 2
  %v119 = vmul.u32 %v118, 5
  %v120 = vsub.s32 %v114, %v119
  %v121 = vsub.s32 0, %v120
  %v122 = vsel %vm112, %v121, %v120
  %vm123 = vcmp.lt.s32.totalorder %v54, 0
  %v124 = vsub.s32 0, %v54
  %v125 = vsel %vm123, %v124, %v54
  %v126 = vmul.u32.u64.compose %v125, 3435973837
  %v127 = vextract.low.u32 %v126
  %v128 = vextract.high.u32 %v126
  %v129 = vshrl.u32 %v128, 2
  %v130 = vmul.u32 %v129, 5
  %v131 = vsub.s32 %v125, %v130
  %v132 = vsub.s32 0, %v131
  %v133 = vsel %vm123, %v132, %v131
  %vm134 = vcmp.lt.s32.totalorder %v55, 0
  %v135 = vsub.s32 0, %v55
  %v136 = vsel %vm134, %v135, %v55
  %v137 = vmul.u32.u64.compose %v136, 3435973837
  %v138 = vextract.low.u32 %v137
  %v139 = vextract.high.u32 %v137
  %v140 = vshrl.u32 %v139, 2
  %v141 = vmul.u32 %v140, 5
  %v142 = vsub.s32 %v136, %v141
  %v143 = vsub.s32 0, %v142
  %v144 = vsel %vm134, %v143, %v142
  %vm145 = vcmp.lt.s32.totalorder %v56, 0
  %v146 = vsub.s32 0, %v56
  %v147 = vsel %vm145, %v146, %v56
  %v148 = vmul.u32.u64.compose %v147, 3435973837
  %v149 = vextract.low.u32 %v148
  %v150 = vextract.high.u32 %v148
  %v151 = vshrl.u32 %v150, 2
  %v152 = vmul.u32 %v151, 5
  %v153 = vsub.s32 %v147, %v152
  %v154 = vsub.s32 0, %v153
  %v155 = vsel %vm145, %v154, %v153
  %vm156 = vcmp.ne.s32.totalorder %v67, 0
  %vm157 = vcmp.ne.s32.totalorder %v78, 0
  %vm158 = vcmp.ne.s32.totalorder %v89, 0
  %vm159 = vcmp.ne.s32.totalorder %v100, 0
  %vm160 = vcmp.ne.s32.totalorder %v111, 0
  %vm161 = vcmp.ne.s32.totalorder %v122, 0
  %vm162 = vcmp.ne.s32.totalorder %v133, 0
  %vm163 = vcmp.ne.s32.totalorder %v144, 0
  %vm164 = vcmp.ne.s32.totalorder %v155, 0
  %vm165 = vcmp.lt.s32.totalorder %v67, 0
  %vm166 = vcmp.lt.s32.totalorder %v78, 0
  %vm167 = vcmp.lt.s32.totalorder %v89, 0
  %vm168 = vcmp.lt.s32.totalorder %v100, 0
  %vm169 = vcmp.lt.s32.totalorder %v111, 0
  %vm170 = vcmp.lt.s32.totalorder %v122, 0
  %vm171 = vcmp.lt.s32.totalorder %v133, 0
  %vm172 = vcmp.lt.s32.totalorder %v144, 0
  %vm173 = vcmp.lt.s32.totalorder %v155, 0
  %vm174 = vmand %vm165, %vm156
  %vm175 = vmand %vm166, %vm157
  %vm176 = vmand %vm167, %vm158
  %vm177 = vmand %vm168, %vm159
  %vm178 = vmand %vm169, %vm160
  %vm179 = vmand %vm170, %vm161
  %vm180 = vmand %vm171, %vm162
  %vm181 = vmand %vm172, %vm163
  %vm182 = vmand %vm173, %vm164
  %v183 = vadd.s32 %v67, 5
  %v184 = vadd.s32 %v78, 5
  %v185 = vadd.s32 %v89, 5
  %v186 = vadd.s32 %v100, 5
  %v187 = vadd.s32 %v111, 5
  %v188 = vadd.s32 %v122, 5
  %v189 = vadd.s32 %v133, 5
  %v190 = vadd.s32 %v144, 5
  %v191 = vadd.s32 %v155, 5
  %v192 = vsel %vm174, %v183, %v67
  %v193 = vsel %vm175, %v184, %v78
  %v194 = vsel %vm176, %v185, %v89
  %v195 = vsel %vm177, %v186, %v100
  %v196 = vsel %vm178, %v187, %v111
  %v197 = vsel %vm179, %v188, %v122
  %v198 = vsel %vm180, %v189, %v133
  %v199 = vsel %vm181, %v190, %v144
  %v200 = vsel %vm182, %v191, %v155
  %vm201 = vcmp.lt.s32.totalorder %v48, 45
  %vm202 = vcmp.lt.s32.totalorder %v49, 45
  %vm203 = vcmp.lt.s32.totalorder %v50, 45
  %vm204 = vcmp.lt.s32.totalorder %v51, 45
  %vm205 = vcmp.lt.s32.totalorder %v52, 45
  %vm206 = vcmp.lt.s32.totalorder %v53, 45
  %vm207 = vcmp.lt.s32.totalorder %v54, 45
  %vm208 = vcmp.lt.s32.totalorder %v55, 45
  %vm209 = vcmp.lt.s32.totalorder %v56, 45
  %vm210 = vcmp.eq.s32.totalorder %v192, 0
  %vm211 = vcmp.eq.s32.totalorder %v193, 0
  %vm212 = vcmp.eq.s32.totalorder %v194, 0
  %vm213 = vcmp.eq.s32.totalorder %v195, 0
  %vm214 = vcmp.eq.s32.totalorder %v196, 0
  %vm215 = vcmp.eq.s32.totalorder %v197, 0
  %vm216 = vcmp.eq.s32.totalorder %v198, 0
  %vm217 = vcmp.eq.s32.totalorder %v199, 0
  %vm218 = vcmp.eq.s32.totalorder %v200, 0
  %vm219 = vmand %vm201, %vm210
  %vm220 = vmand %vm202, %vm211
  %vm221 = vmand %vm203, %vm212
  %vm222 = vmand %vm204, %vm213
  %vm223 = vmand %vm205, %vm214
  %vm224 = vmand %vm206, %vm215
  %vm225 = vmand %vm207, %vm216
  %vm226 = vmand %vm208, %vm217
  %vm227 = vmand %vm209, %vm218
  %vm228 = vcmp.eq.s32.totalorder %v192, 1
  %vm229 = vcmp.eq.s32.totalorder %v193, 1
  %vm230 = vcmp.eq.s32.totalorder %v194, 1
  %vm231 = vcmp.eq.s32.totalorder %v195, 1
  %vm232 = vcmp.eq.s32.totalorder %v196, 1
  %vm233 = vcmp.eq.s32.totalorder %v197, 1
  %vm234 = vcmp.eq.s32.totalorder %v198, 1
  %vm235 = vcmp.eq.s32.totalorder %v199, 1
  %vm236 = vcmp.eq.s32.totalorder %v200, 1
  %vm237 = vcmp.eq.s32.totalorder %v192, 2
  %vm238 = vcmp.eq.s32.totalorder %v193, 2
  %vm239 = vcmp.eq.s32.totalorder %v194, 2
  %vm240 = vcmp.eq.s32.totalorder %v195, 2
  %vm241 = vcmp.eq.s32.totalorder %v196, 2
  %vm242 = vcmp.eq.s32.totalorder %v197, 2
  %vm243 = vcmp.eq.s32.totalorder %v198, 2
  %vm244 = vcmp.eq.s32.totalorder %v199, 2
  %vm245 = vcmp.eq.s32.totalorder %v200, 2
  %vm246 = vmor %vm228, %vm237
  %vm247 = vmor %vm229, %vm238
  %vm248 = vmor %vm230, %vm239
  %vm249 = vmor %vm231, %vm240
  %vm250 = vmor %vm232, %vm241
  %vm251 = vmor %vm233, %vm242
  %vm252 = vmor %vm234, %vm243
  %vm253 = vmor %vm235, %vm244
  %vm254 = vmor %vm236, %vm245
  %vm255 = vmand %vm201, %vm246
  %vm256 = vmand %vm202, %vm247
  %vm257 = vmand %vm203, %vm248
  %vm258 = vmand %vm204, %vm249
  %vm259 = vmand %vm205, %vm250
  %vm260 = vmand %vm206, %vm251
  %vm261 = vmand %vm207, %vm252
  %vm262 = vmand %vm208, %vm253
  %vm263 = vmand %vm209, %vm254
  %v264 = vld [vmem:[%s0] sm:$0xf]
  %v265 = vld [vmem:[%s0 + $0x4] sm:$0xf]
  %267 = vset.pattern.permute.xlu0 0
  %268 = vperm.xlu0 %267, %v25
  %v269 = vpop.permute.xlu0 %268
  %272 = vset.pattern.permute.xlu0 0
  %273 = vperm.xlu0 %272, %v26
  %v274 = vpop.permute.xlu0 %273
  %277 = vset.pattern.permute.xlu0 0
  %278 = vperm.xlu0 %277, %v27
  %v279 = vpop.permute.xlu0 %278
  %282 = vset.pattern.permute.xlu0 0
  %283 = vperm.xlu0 %282, %v28
  %v284 = vpop.permute.xlu0 %283
  %v290 = vunpack.c.l.b16 %v21
  %v291 = vunpack.c.l.b16 %v22
  %v292 = vunpack.c.l.b16 %v23
  %v293 = vunpack.c.l.b16 %v24
  %v294 = vpack.c.b16 %v291, %v290
  %v295 = vpack.c.b16 %v293, %v292
  %v298 = vunpack.c.l.b16 %v264
  %v299 = vunpack.c.l.b16 %v265
  %v300 = vpack.c.b16 %v299, %v298
  %vm302 = vcmask 130048
  %v304 = vsel %vm302, %v294, 0
  %v307 = vsel %vm302, %v295, 0
  %309 = vmatprep.subr.bf16.mxu0 0
  %310 = vmatpush1.bf16.msra.mxu0 0
  %311 = vmatprep.subr.bf16.mxu0 0
  %312 = vmatpush1.bf16.msra.mxu0 0
  %313 = vmatprep.subr.bf16.mxu0 0
  %314 = vmatpush1.bf16.msra.mxu0 0
  %315 = vmatprep.subr.bf16.mxu0 0
  %316 = vmatpush1.bf16.msra.mxu0 0
  %317 = vmatprep.subr.bf16.mxu0 0
  %318 = vmatpush1.bf16.msra.mxu0 0
  %319 = vmatprep.subr.bf16.mxu0 0
  %320 = vmatpush1.bf16.msra.mxu0 0
  %321 = vmatprep.subr.bf16.mxu0 0
  %322 = vmatpush1.bf16.msra.mxu0 0
  %323 = vmatprep.subr.bf16.mxu0 0
  %324 = vmatpush1.bf16.msra.mxu0 %v300
  %325 = vmatprep.subr.bf16.mxu0 0
  %326 = vmatpush2.bf16.msra.mxu0 0
  %327 = vmatprep.subr.bf16.mxu0 0
  %328 = vmatpush2.bf16.msra.mxu0 0
  %329 = vmatprep.subr.bf16.mxu0 0
  %330 = vmatpush2.bf16.msra.mxu0 0
  %331 = vmatprep.subr.bf16.mxu0 0
  %332 = vmatpush2.bf16.msra.mxu0 0
  %333 = vmatprep.subr.bf16.mxu0 0
  %334 = vmatpush2.bf16.msra.mxu0 0
  %335 = vmatprep.subr.bf16.mxu0 0
  %336 = vmatpush2.bf16.msra.mxu0 0
  %337 = vmatprep.subr.bf16.mxu0 0
  %338 = vmatpush2.bf16.msra.mxu0 0
  %339 = vmatprep.subr.bf16.mxu0 0
  %340 = vmatpush2.bf16.msra.mxu0 0
  %341 = vmatprep.mubr.bf16.mxu0 0
  %342 = vmatmul.mubr.bf16.gmra.mxu0 %v304
  %v343 = vpop.f32.mrf.mxu0
  %v344 = vadd.f32 %v269, %v343
  %v345 = vpop.f32.mrf.mxu0
  %v346 = vpop.f32.mrf.mxu0
  %v347 = vadd.f32 %v274, %v346
  %v348 = vpop.f32.mrf.mxu0
  %349 = vmatprep.mubr.bf16.mxu0 0
  %350 = vmatmul.mubr.bf16.gmra.mxu0 %v307
  %v351 = vpop.f32.mrf.mxu0
  %v352 = vadd.f32 %v279, %v351
  %v353 = vpop.f32.mrf.mxu0
  %v354 = vpop.f32.mrf.mxu0
  %v355 = vadd.f32 %v284, %v354
  %v356 = vpop.f32.mrf.mxu0
  %357 = vdwg.mxu0
  %vm358 = vcmp.ge.f32.partialorder %v344, 0.0
  %vm359 = vcmp.ge.f32.partialorder %v347, 0.0
  %vm360 = vcmp.ge.f32.partialorder %v352, 0.0
  %vm361 = vcmp.ge.f32.partialorder %v355, 0.0
  %v362 = vmul.f32 %v344, 0.01
  %v363 = vmul.f32 %v347, 0.01
  %v364 = vmul.f32 %v352, 0.01
  %v365 = vmul.f32 %v355, 0.01
  %v366 = vsel %vm358, %v344, %v362
  %v367 = vsel %vm359, %v347, %v363
  %v368 = vsel %vm360, %v352, %v364
  %v369 = vsel %vm361, %v355, %v365
  %v370 = vpack.c.bf16 %v367, %v366
  %v371 = vpack.c.bf16 %v369, %v368
  %373 = vset.pattern.permute.xlu0 0
  %374 = vperm.xlu0 %373, %v38
  %v375 = vpop.permute.xlu0 %374
  %378 = vset.pattern.permute.xlu0 0
  %379 = vperm.xlu0 %378, %v39
  %v380 = vpop.permute.xlu0 %379
  %383 = vset.pattern.permute.xlu0 0
  %384 = vperm.xlu0 %383, %v40
  %v385 = vpop.permute.xlu0 %384
  %388 = vset.pattern.permute.xlu0 0
  %389 = vperm.xlu0 %388, %v41
  %v390 = vpop.permute.xlu0 %389
  %393 = vset.pattern.permute.xlu0 0
  %394 = vperm.xlu0 %393, %v42
  %v395 = vpop.permute.xlu0 %394
  %398 = vset.pattern.permute.xlu0 0
  %399 = vperm.xlu0 %398, %v43
  %v400 = vpop.permute.xlu0 %399
  %403 = vset.pattern.permute.xlu0 0
  %404 = vperm.xlu0 %403, %v44
  %v405 = vpop.permute.xlu0 %404
  %408 = vset.pattern.permute.xlu0 0
  %409 = vperm.xlu0 %408, %v45
  %v410 = vpop.permute.xlu0 %409
  %413 = vset.pattern.permute.xlu0 0
  %414 = vperm.xlu0 %413, %v46
  %v415 = vpop.permute.xlu0 %414
  %v426 = vunpack.c.l.b16 %v29
  %v427 = vunpack.c.l.b16 %v30
  %v428 = vunpack.c.l.b16 %v31
  %v429 = vunpack.c.l.b16 %v32
  %v430 = vunpack.c.l.b16 %v33
  %v431 = vunpack.c.l.b16 %v34
  %v432 = vunpack.c.l.b16 %v35
  %v433 = vunpack.c.l.b16 %v36
  %v434 = vunpack.c.l.b16 %v37
  %v435 = vpack.c.b16 %v427, %v426
  %v436 = vpack.c.b16 %v429, %v428
  %v437 = vpack.c.b16 %v431, %v430
  %v438 = vpack.c.b16 %v433, %v432
  %v439 = vpack.c.b16 %v434, %v434
  %vm440 = vcmask 261120
  %v442 = vsel %vm440, %v435, 0
  %v445 = vsel %vm440, %v436, 0
  %v448 = vsel %vm440, %v437, 0
  %v451 = vsel %vm440, %v438, 0
  %v454 = vsel %vm440, %v439, 0
  %456 = vmatprep.subr.bf16.mxu0 0
  %457 = vmatpush1.bf16.msra.mxu0 0
  %458 = vmatprep.subr.bf16.mxu0 0
  %459 = vmatpush1.bf16.msra.mxu0 0
  %460 = vmatprep.subr.bf16.mxu0 0
  %461 = vmatpush1.bf16.msra.mxu0 0
  %462 = vmatprep.subr.bf16.mxu0 0
  %463 = vmatpush1.bf16.msra.mxu0 0
  %464 = vmatprep.subr.bf16.mxu0 0
  %465 = vmatpush1.bf16.msra.mxu0 0
  %466 = vmatprep.subr.bf16.mxu0 0
  %467 = vmatpush1.bf16.msra.mxu0 0
  %468 = vmatprep.subr.bf16.mxu0 0
  %469 = vmatpush1.bf16.msra.mxu0 %v371
  %470 = vmatprep.subr.bf16.mxu0 0
  %471 = vmatpush1.bf16.msra.mxu0 %v370
  %472 = vmatprep.subr.bf16.mxu0 0
  %473 = vmatpush2.bf16.msra.mxu0 0
  %474 = vmatprep.subr.bf16.mxu0 0
  %475 = vmatpush2.bf16.msra.mxu0 0
  %476 = vmatprep.subr.bf16.mxu0 0
  %477 = vmatpush2.bf16.msra.mxu0 0
  %478 = vmatprep.subr.bf16.mxu0 0
  %479 = vmatpush2.bf16.msra.mxu0 0
  %480 = vmatprep.subr.bf16.mxu0 0
  %481 = vmatpush2.bf16.msra.mxu0 0
  %482 = vmatprep.subr.bf16.mxu0 0
  %483 = vmatpush2.bf16.msra.mxu0 0
  %484 = vmatprep.subr.bf16.mxu0 0
  %485 = vmatpush2.bf16.msra.mxu0 0
  %486 = vmatprep.subr.bf16.mxu0 0
  %487 = vmatpush2.bf16.msra.mxu0 0
  %488 = vmatprep.mubr.bf16.mxu0 0
  %489 = vmatmul.mubr.bf16.gmra.mxu0 %v442
  %v490 = vpop.f32.mrf.mxu0
  %v491 = vadd.f32 %v375, %v490
  %v492 = vpop.f32.mrf.mxu0
  %v493 = vpop.f32.mrf.mxu0
  %v494 = vadd.f32 %v380, %v493
  %v495 = vpop.f32.mrf.mxu0
  %496 = vmatprep.mubr.bf16.mxu0 0
  %497 = vmatmul.mubr.bf16.gmra.mxu0 %v445
  %v498 = vpop.f32.mrf.mxu0
  %v499 = vadd.f32 %v385, %v498
  %v500 = vpop.f32.mrf.mxu0
  %v501 = vpop.f32.mrf.mxu0
  %v502 = vadd.f32 %v390, %v501
  %v503 = vpop.f32.mrf.mxu0
  %504 = vmatprep.mubr.bf16.mxu0 0
  %505 = vmatmul.mubr.bf16.gmra.mxu0 %v448
  %v506 = vpop.f32.mrf.mxu0
  %v507 = vadd.f32 %v395, %v506
  %v508 = vpop.f32.mrf.mxu0
  %v509 = vpop.f32.mrf.mxu0
  %v510 = vadd.f32 %v400, %v509
  %v511 = vpop.f32.mrf.mxu0
  %512 = vmatprep.mubr.bf16.mxu0 0
  %513 = vmatmul.mubr.bf16.gmra.mxu0 %v451
  %v514 = vpop.f32.mrf.mxu0
  %v515 = vadd.f32 %v405, %v514
  %v516 = vpop.f32.mrf.mxu0
  %v517 = vpop.f32.mrf.mxu0
  %v518 = vadd.f32 %v410, %v517
  %v519 = vpop.f32.mrf.mxu0
  %520 = vmatprep.mubr.bf16.mxu0 0
  %521 = vmatmul.mubr.bf16.gmra.mxu0 %v454
  %v522 = vpop.f32.mrf.mxu0
  %v523 = vadd.f32 %v415, %v522
  %v524 = vpop.f32.mrf.mxu0
  %v525 = vpop.f32.mrf.mxu0
  %v526 = vpop.f32.mrf.mxu0
  %527 = vdwg.mxu0
  %v528 = vxor.u32 %v491, 2147483648
  %v529 = vxor.u32 %v494, 2147483648
  %v530 = vxor.u32 %v499, 2147483648
  %v531 = vxor.u32 %v502, 2147483648
  %v532 = vxor.u32 %v507, 2147483648
  %v533 = vxor.u32 %v510, 2147483648
  %v534 = vxor.u32 %v515, 2147483648
  %v535 = vxor.u32 %v518, 2147483648
  %v536 = vxor.u32 %v523, 2147483648
  %v537 = vmul.f32 %v528, 1.442695
  %v538 = vpow.pop %v537
  %v539 = vmul.f32 %v529, 1.442695
  %v540 = vpow.pop %v539
  %v541 = vmul.f32 %v530, 1.442695
  %v542 = vpow.pop %v541
  %v543 = vmul.f32 %v531, 1.442695
  %v544 = vpow.pop %v543
  %v545 = vmul.f32 %v532, 1.442695
  %v546 = vpow.pop %v545
  %v547 = vmul.f32 %v533, 1.442695
  %v548 = vpow.pop %v547
  %v549 = vmul.f32 %v534, 1.442695
  %v550 = vpow.pop %v549
  %v551 = vmul.f32 %v535, 1.442695
  %v552 = vpow.pop %v551
  %v553 = vmul.f32 %v536, 1.442695
  %v554 = vpow.pop %v553
  %v555 = vadd.f32 %v538, 1.0
  %v556 = vadd.f32 %v540, 1.0
  %v557 = vadd.f32 %v542, 1.0
  %v558 = vadd.f32 %v544, 1.0
  %v559 = vadd.f32 %v546, 1.0
  %v560 = vadd.f32 %v548, 1.0
  %v561 = vadd.f32 %v550, 1.0
  %v562 = vadd.f32 %v552, 1.0
  %v563 = vadd.f32 %v554, 1.0
  %v564 = vrcp.pop %v555
  %v565 = vmul.f32 1.0, %v564
  %v566 = vrcp.pop %v556
  %v567 = vmul.f32 1.0, %v566
  %v568 = vrcp.pop %v557
  %v569 = vmul.f32 1.0, %v568
  %v570 = vrcp.pop %v558
  %v571 = vmul.f32 1.0, %v570
  %v572 = vrcp.pop %v559
  %v573 = vmul.f32 1.0, %v572
  %v574 = vrcp.pop %v560
  %v575 = vmul.f32 1.0, %v574
  %v576 = vrcp.pop %v561
  %v577 = vmul.f32 1.0, %v576
  %v578 = vrcp.pop %v562
  %v579 = vmul.f32 1.0, %v578
  %v580 = vrcp.pop %v563
  %v581 = vmul.f32 1.0, %v580
  %v582 = vsub.f32 %v565, 0.5
  %v583 = vsub.f32 %v567, 0.5
  %v584 = vsub.f32 %v569, 0.5
  %v585 = vsub.f32 %v571, 0.5
  %v586 = vsub.f32 %v573, 0.5
  %v587 = vsub.f32 %v575, 0.5
  %v588 = vsub.f32 %v577, 0.5
  %v589 = vsub.f32 %v579, 0.5
  %v590 = vsub.f32 %v581, 0.5
  %v591 = vsel %vm255, %v582, %v491
  %v592 = vsel %vm256, %v583, %v494
  %v593 = vsel %vm257, %v584, %v499
  %v594 = vsel %vm258, %v585, %v502
  %v595 = vsel %vm259, %v586, %v507
  %v596 = vsel %vm260, %v587, %v510
  %v597 = vsel %vm261, %v588, %v515
  %v598 = vsel %vm262, %v589, %v518
  %v599 = vsel %vm263, %v590, %v523
  %v600 = vsel %vm219, %v565, %v591
  %v601 = vsel %vm220, %v567, %v592
  %v602 = vsel %vm221, %v569, %v593
  %v603 = vsel %vm222, %v571, %v594
  %v604 = vsel %vm223, %v573, %v595
  %v605 = vsel %vm224, %v575, %v596
  %v606 = vsel %vm225, %v577, %v597
  %v607 = vsel %vm226, %v579, %v598
  %v608 = vsel %vm227, %v581, %v599
  %609 = vst [vmem:[%s5] sm:$0xff] %v600
  %610 = vst [vmem:[%s5 + $0x8] sm:$0xff] %v601
  %611 = vst [vmem:[%s5 + $0x10] sm:$0xff] %v602
  %612 = vst [vmem:[%s5 + $0x18] sm:$0xff] %v603
  %613 = vst [vmem:[%s5 + $0x20] sm:$0xff] %v604
  %614 = vst [vmem:[%s5 + $0x28] sm:$0xff] %v605
  %615 = vst [vmem:[%s5 + $0x30] sm:$0xff] %v606
  %616 = vst [vmem:[%s5 + $0x38] sm:$0xff] %v607
  %617 = vst [vmem:[%s5 + $0x40] sm:$0xff] %v608
  %s618 = scalar_lea.vmem %s0, 8
  %v619 = vld [vmem:[%s618] sm:$0xf]
  %v620 = vld [vmem:[%s618 + $0x4] sm:$0xf]
  %v623 = vunpack.c.l.b16 %v619
  %v624 = vunpack.c.l.b16 %v620
  %v625 = vpack.c.b16 %v624, %v623
  %627 = vmatprep.subr.bf16.mxu0 0
  %628 = vmatpush1.bf16.msra.mxu0 0
  %629 = vmatprep.subr.bf16.mxu0 0
  %630 = vmatpush1.bf16.msra.mxu0 0
  %631 = vmatprep.subr.bf16.mxu0 0
  %632 = vmatpush1.bf16.msra.mxu0 0
  %633 = vmatprep.subr.bf16.mxu0 0
  %634 = vmatpush1.bf16.msra.mxu0 0
  %635 = vmatprep.subr.bf16.mxu0 0
  %636 = vmatpush1.bf16.msra.mxu0 0
  %637 = vmatprep.subr.bf16.mxu0 0
  %638 = vmatpush1.bf16.msra.mxu0 0
  %639 = vmatprep.subr.bf16.mxu0 0
  %640 = vmatpush1.bf16.msra.mxu0 0
  %641 = vmatprep.subr.bf16.mxu0 0
  %642 = vmatpush1.bf16.msra.mxu0 %v625
  %643 = vmatprep.subr.bf16.mxu0 0
  %644 = vmatpush2.bf16.msra.mxu0 0
  %645 = vmatprep.subr.bf16.mxu0 0
  %646 = vmatpush2.bf16.msra.mxu0 0
  %647 = vmatprep.subr.bf16.mxu0 0
  %648 = vmatpush2.bf16.msra.mxu0 0
  %649 = vmatprep.subr.bf16.mxu0 0
  %650 = vmatpush2.bf16.msra.mxu0 0
  %651 = vmatprep.subr.bf16.mxu0 0
  %652 = vmatpush2.bf16.msra.mxu0 0
  %653 = vmatprep.subr.bf16.mxu0 0
  %654 = vmatpush2.bf16.msra.mxu0 0
  %655 = vmatprep.subr.bf16.mxu0 0
  %656 = vmatpush2.bf16.msra.mxu0 0
  %657 = vmatprep.subr.bf16.mxu0 0
  %658 = vmatpush2.bf16.msra.mxu0 0
  %659 = vmatprep.mubr.bf16.mxu0 0
  %660 = vmatmul.mubr.bf16.gmra.mxu0 %v304
  %v661 = vpop.f32.mrf.mxu0
  %v662 = vadd.f32 %v269, %v661
  %v663 = vpop.f32.mrf.mxu0
  %v664 = vpop.f32.mrf.mxu0
  %v665 = vadd.f32 %v274, %v664
  %v666 = vpop.f32.mrf.mxu0
  %667 = vmatprep.mubr.bf16.mxu0 0
  %668 = vmatmul.mubr.bf16.gmra.mxu0 %v307
  %v669 = vpop.f32.mrf.mxu0
  %v670 = vadd.f32 %v279, %v669
  %v671 = vpop.f32.mrf.mxu0
  %v672 = vpop.f32.mrf.mxu0
  %v673 = vadd.f32 %v284, %v672
  %v674 = vpop.f32.mrf.mxu0
  %675 = vdwg.mxu0
  %vm676 = vcmp.ge.f32.partialorder %v662, 0.0
  %vm677 = vcmp.ge.f32.partialorder %v665, 0.0
  %vm678 = vcmp.ge.f32.partialorder %v670, 0.0
  %vm679 = vcmp.ge.f32.partialorder %v673, 0.0
  %v680 = vmul.f32 %v662, 0.01
  %v681 = vmul.f32 %v665, 0.01
  %v682 = vmul.f32 %v670, 0.01
  %v683 = vmul.f32 %v673, 0.01
  %v684 = vsel %vm676, %v662, %v680
  %v685 = vsel %vm677, %v665, %v681
  %v686 = vsel %vm678, %v670, %v682
  %v687 = vsel %vm679, %v673, %v683
  %v688 = vpack.c.bf16 %v685, %v684
  %v689 = vpack.c.bf16 %v687, %v686
  %690 = vmatprep.subr.bf16.mxu0 0
  %691 = vmatpush1.bf16.msra.mxu0 0
  %692 = vmatprep.subr.bf16.mxu0 0
  %693 = vmatpush1.bf16.msra.mxu0 0
  %694 = vmatprep.subr.bf16.mxu0 0
  %695 = vmatpush1.bf16.msra.mxu0 0
  %696 = vmatprep.subr.bf16.mxu0 0
  %697 = vmatpush1.bf16.msra.mxu0 0
  %698 = vmatprep.subr.bf16.mxu0 0
  %699 = vmatpush1.bf16.msra.mxu0 0
  %700 = vmatprep.subr.bf16.mxu0 0
  %701 = vmatpush1.bf16.msra.mxu0 0
  %702 = vmatprep.subr.bf16.mxu0 0
  %703 = vmatpush1.bf16.msra.mxu0 %v689
  %704 = vmatprep.subr.bf16.mxu0 0
  %705 = vmatpush1.bf16.msra.mxu0 %v688
  %706 = vmatprep.subr.bf16.mxu0 0
  %707 = vmatpush2.bf16.msra.mxu0 0
  %708 = vmatprep.subr.bf16.mxu0 0
  %709 = vmatpush2.bf16.msra.mxu0 0
  %710 = vmatprep.subr.bf16.mxu0 0
  %711 = vmatpush2.bf16.msra.mxu0 0
  %712 = vmatprep.subr.bf16.mxu0 0
  %713 = vmatpush2.bf16.msra.mxu0 0
  %714 = vmatprep.subr.bf16.mxu0 0
  %715 = vmatpush2.bf16.msra.mxu0 0
  %716 = vmatprep.subr.bf16.mxu0 0
  %717 = vmatpush2.bf16.msra.mxu0 0
  %718 = vmatprep.subr.bf16.mxu0 0
  %719 = vmatpush2.bf16.msra.mxu0 0
  %720 = vmatprep.subr.bf16.mxu0 0
  %721 = vmatpush2.bf16.msra.mxu0 0
  %722 = vmatprep.mubr.bf16.mxu0 0
  %723 = vmatmul.mubr.bf16.gmra.mxu0 %v442
  %v724 = vpop.f32.mrf.mxu0
  %v725 = vadd.f32 %v375, %v724
  %v726 = vpop.f32.mrf.mxu0
  %v727 = vpop.f32.mrf.mxu0
  %v728 = vadd.f32 %v380, %v727
  %v729 = vpop.f32.mrf.mxu0
  %730 = vmatprep.mubr.bf16.mxu0 0
  %731 = vmatmul.mubr.bf16.gmra.mxu0 %v445
  %v732 = vpop.f32.mrf.mxu0
  %v733 = vadd.f32 %v385, %v732
  %v734 = vpop.f32.mrf.mxu0
  %v735 = vpop.f32.mrf.mxu0
  %v736 = vadd.f32 %v390, %v735
  %v737 = vpop.f32.mrf.mxu0
  %738 = vmatprep.mubr.bf16.mxu0 0
  %739 = vmatmul.mubr.bf16.gmra.mxu0 %v448
  %v740 = vpop.f32.mrf.mxu0
  %v741 = vadd.f32 %v395, %v740
  %v742 = vpop.f32.mrf.mxu0
  %v743 = vpop.f32.mrf.mxu0
  %v744 = vadd.f32 %v400, %v743
  %v745 = vpop.f32.mrf.mxu0
  %746 = vmatprep.mubr.bf16.mxu0 0
  %747 = vmatmul.mubr.bf16.gmra.mxu0 %v451
  %v748 = vpop.f32.mrf.mxu0
  %v749 = vadd.f32 %v405, %v748
  %v750 = vpop.f32.mrf.mxu0
  %v751 = vpop.f32.mrf.mxu0
  %v752 = vadd.f32 %v410, %v751
  %v753 = vpop.f32.mrf.mxu0
  %754 = vmatprep.mubr.bf16.mxu0 0
  %755 = vmatmul.mubr.bf16.gmra.mxu0 %v454
  %v756 = vpop.f32.mrf.mxu0
  %v757 = vadd.f32 %v415, %v756
  %v758 = vpop.f32.mrf.mxu0
  %v759 = vpop.f32.mrf.mxu0
  %v760 = vpop.f32.mrf.mxu0
  %761 = vdwg.mxu0
  %v762 = vxor.u32 %v725, 2147483648
  %v763 = vxor.u32 %v728, 2147483648
  %v764 = vxor.u32 %v733, 2147483648
  %v765 = vxor.u32 %v736, 2147483648
  %v766 = vxor.u32 %v741, 2147483648
  %v767 = vxor.u32 %v744, 2147483648
  %v768 = vxor.u32 %v749, 2147483648
  %v769 = vxor.u32 %v752, 2147483648
  %v770 = vxor.u32 %v757, 2147483648
  %v771 = vmul.f32 %v762, 1.442695
  %v772 = vpow.pop %v771
  %v773 = vmul.f32 %v763, 1.442695
  %v774 = vpow.pop %v773
  %v775 = vmul.f32 %v764, 1.442695
  %v776 = vpow.pop %v775
  %v777 = vmul.f32 %v765, 1.442695
  %v778 = vpow.pop %v777
  %v779 = vmul.f32 %v766, 1.442695
  %v780 = vpow.pop %v779
  %v781 = vmul.f32 %v767, 1.442695
  %v782 = vpow.pop %v781
  %v783 = vmul.f32 %v768, 1.442695
  %v784 = vpow.pop %v783
  %v785 = vmul.f32 %v769, 1.442695
  %v786 = vpow.pop %v785
  %v787 = vmul.f32 %v770, 1.442695
  %v788 = vpow.pop %v787
  %v789 = vadd.f32 %v772, 1.0
  %v790 = vadd.f32 %v774, 1.0
  %v791 = vadd.f32 %v776, 1.0
  %v792 = vadd.f32 %v778, 1.0
  %v793 = vadd.f32 %v780, 1.0
  %v794 = vadd.f32 %v782, 1.0
  %v795 = vadd.f32 %v784, 1.0
  %v796 = vadd.f32 %v786, 1.0
  %v797 = vadd.f32 %v788, 1.0
  %v798 = vrcp.pop %v789
  %v799 = vmul.f32 1.0, %v798
  %v800 = vrcp.pop %v790
  %v801 = vmul.f32 1.0, %v800
  %v802 = vrcp.pop %v791
  %v803 = vmul.f32 1.0, %v802
  %v804 = vrcp.pop %v792
  %v805 = vmul.f32 1.0, %v804
  %v806 = vrcp.pop %v793
  %v807 = vmul.f32 1.0, %v806
  %v808 = vrcp.pop %v794
  %v809 = vmul.f32 1.0, %v808
  %v810 = vrcp.pop %v795
  %v811 = vmul.f32 1.0, %v810
  %v812 = vrcp.pop %v796
  %v813 = vmul.f32 1.0, %v812
  %v814 = vrcp.pop %v797
  %v815 = vmul.f32 1.0, %v814
  %v816 = vsub.f32 %v799, 0.5
  %v817 = vsub.f32 %v801, 0.5
  %v818 = vsub.f32 %v803, 0.5
  %v819 = vsub.f32 %v805, 0.5
  %v820 = vsub.f32 %v807, 0.5
  %v821 = vsub.f32 %v809, 0.5
  %v822 = vsub.f32 %v811, 0.5
  %v823 = vsub.f32 %v813, 0.5
  %v824 = vsub.f32 %v815, 0.5
  %v825 = vsel %vm255, %v816, %v725
  %v826 = vsel %vm256, %v817, %v728
  %v827 = vsel %vm257, %v818, %v733
  %v828 = vsel %vm258, %v819, %v736
  %v829 = vsel %vm259, %v820, %v741
  %v830 = vsel %vm260, %v821, %v744
  %v831 = vsel %vm261, %v822, %v749
  %v832 = vsel %vm262, %v823, %v752
  %v833 = vsel %vm263, %v824, %v757
  %v834 = vsel %vm219, %v799, %v825
  %v835 = vsel %vm220, %v801, %v826
  %v836 = vsel %vm221, %v803, %v827
  %v837 = vsel %vm222, %v805, %v828
  %v838 = vsel %vm223, %v807, %v829
  %v839 = vsel %vm224, %v809, %v830
  %v840 = vsel %vm225, %v811, %v831
  %v841 = vsel %vm226, %v813, %v832
  %v842 = vsel %vm227, %v815, %v833
  %s843 = scalar_lea.vmem %s5, 72
  %844 = vst [vmem:[%s843] sm:$0xff] %v834
  %845 = vst [vmem:[%s843 + $0x8] sm:$0xff] %v835
  %846 = vst [vmem:[%s843 + $0x10] sm:$0xff] %v836
  %847 = vst [vmem:[%s843 + $0x18] sm:$0xff] %v837
  %848 = vst [vmem:[%s843 + $0x20] sm:$0xff] %v838
  %849 = vst [vmem:[%s843 + $0x28] sm:$0xff] %v839
  %850 = vst [vmem:[%s843 + $0x30] sm:$0xff] %v840
  %851 = vst [vmem:[%s843 + $0x38] sm:$0xff] %v841
  %852 = vst [vmem:[%s843 + $0x40] sm:$0xff] %v842
  // Predicated region
  $region22: #{prediction_network_forward.1} parent=0 // pred_check
    _
  $region23: #{prediction_network_forward.1} parent=0 // pred_check_branch
    %854 = sbr.rel (0) target = $region25
  $region24: #{prediction_network_forward.1} parent=0 // pred_region
    _
  $region25: #{prediction_network_forward.1} parent=0 // pred_fallthru
    _
  // Predicated region
  $region26: #{prediction_network_forward.1} parent=0 // pred_check
    _
  $region27: #{prediction_network_forward.1} parent=0 // pred_check_branch
    %856 = sbr.rel (0) target = $region29
  $region28: #{prediction_network_forward.1} parent=0 // pred_region
    _
  $region29: #{prediction_network_forward.1} parent=0 // pred_fallthru
    _

</llo_original>
